<compile_context>
chip_gen: v6e
topology: v6e:2x2x1
jax: 0.10.0
libtpu: 0.0.40
codegen_flags: <defaults>
</compile_context>

<pallas_src>
import functools

import jax
import jax.numpy as jnp
from jax.experimental import pallas as pl
from jax.experimental.pallas import tpu as pltpu


# ----------------------------- kernel body ---------------------------------


def _layernorm_kernel(x_ref, gamma_ref, beta_ref, o_ref, *, eps):
    # x_ref: (TILE_ROWS, hidden) in VMEM; gamma/beta: (1, hidden) f32, resident.
    x = x_ref[...].astype(jnp.float32)
    n = x.shape[-1]

    # Row reductions go through the XLU; on v5e/v6e they are free filler under
    # the HBM roofline.
    # TODO(synk): if an xprof trace on v7x (HBM ~3.2 TB/s/TC) shows the 2 XLUs
    # as the binding slot, move these reductions to the idle MXU via
    # x @ ones((n, 1), f32) with preferred_element_type=jnp.float32.
    mean = jnp.mean(x, axis=-1, keepdims=True)
    centered = x - mean

    # Unbiased variance (torch.std default uses N-1 in the denominator).
    var_unbiased = jnp.sum(centered * centered, axis=-1, keepdims=True) / (n - 1)
    denom = jnp.sqrt(var_unbiased) + eps  # eps added to std, NOT to variance.

    # Reciprocal on the otherwise-idle EUP + one Newton refinement step to get
    # near-f32 accuracy; avoids a VPU divide sequence.
    inv = pl.reciprocal(denom, approx=True)
    inv = inv * (2.0 - denom * inv)

    out = gamma_ref[...] * (centered * inv) + beta_ref[...]
    o_ref[...] = out.astype(o_ref.dtype)


# --------------------------- tiling heuristics ------------------------------


def _vmem_limit_bytes():
    """Generation-aware scoped-VMEM request (v5e/v6e: 96 MiB, v7x: 48 MiB)."""
    try:
        physical = int(pltpu.get_tpu_info().vmem_capacity_bytes)
    except Exception:
        physical = 64 * 1024 * 1024  # conservative fallback = v7x per-TC VMEM
    return int(min(physical * 3 // 4, 96 * 1024 * 1024))


def _sublane_multiple(itemsize):
    # Sub-32-bit dtypes pack along sublanes: bf16 -> 16 rows/vreg, int8/fp8 -> 32.
    if itemsize >= 4:
        return 8
    if itemsize == 2:
        return 16
    return 32


def _pick_tile_rows(rows, hidden, in_bytes, out_bytes, vmem_limit):
    """Row-tile sized by bytes, bounded by the VMEM budget and >= ~8 grid steps."""
    sub = _sublane_multiple(min(in_bytes, out_bytes))

    # VMEM footprint per tile row: 2x double-buffered input blocks + 2x output
    # blocks (pipeline) plus ~3 f32-sized in-kernel temporaries.
    per_row = hidden * (2 * in_bytes + 2 * out_bytes + 3 * 4)
    budget_rows = max(sub, int(0.6 * vmem_limit) // per_row)

    # Bandwidth target: ~4 MiB (f32-equivalent) per block reaches ~86% of HBM
    # roofline; larger blocks only add VMEM pressure.
    target_rows = max(sub, (4 * 1024 * 1024) // (hidden * 4))

    tr = min(budget_rows, target_rows)

    # Keep the software pipeline full: >= ~8 grid steps (>= 4 per TensorCore on
    # v7x with dimension_semantics=("parallel",)) whenever the problem is big
    # enough; tiny problems just take one or two steps.
    min_steps = 8
    if rows >= min_steps * sub:
        tr = min(tr, pl.cdiv(rows, min_steps))
    else:
        tr = min(tr, max(sub, rows))

    tr = max(sub, (tr // sub) * sub)
    return tr


# ------------------------------- wrapper ------------------------------------


def layer_norm(x, a_2, b_2, eps=1e-6, tile_rows=None):
    """LayerNorm over the last axis of x. x: (..., hidden)."""
    orig_shape = x.shape
    hidden = orig_shape[-1]
    if hidden < 2:
        raise ValueError("hidden must be >= 2 (unbiased std divides by N-1)")

    rows = 1
    for d in orig_shape[:-1]:
        rows *= d

    x2d = x.reshape(rows, hidden)
    gamma = a_2.astype(jnp.float32).reshape(1, hidden)
    beta = b_2.astype(jnp.float32).reshape(1, hidden)

    in_bytes = jnp.dtype(x.dtype).itemsize
    out_bytes = in_bytes  # output matches input dtype
    vmem_limit = _vmem_limit_bytes()

    if tile_rows is None:
        tile_rows = _pick_tile_rows(rows, hidden, in_bytes, out_bytes, vmem_limit)

    # Ragged last block is handled by Pallas (no jnp.pad / slice round-trips
    # through HBM): reads of the out-of-bounds tail are padded, stores are
    # clipped to the array bounds, and rows are computed independently so the
    # garbage tail rows never affect valid output.
    num_tiles = pl.cdiv(rows, tile_rows)

    kernel = functools.partial(_layernorm_kernel, eps=eps)

    cost = pl.CostEstimate(
        flops=8 * rows * hidden,                 # sub, square, scale, affine, reductions
        transcendentals=2 * rows,                # sqrt + reciprocal per row
        bytes_accessed=rows * hidden * (in_bytes + out_bytes) + 2 * hidden * 4,
    )

    out2d = pl.pallas_call(
        kernel,
        out_shape=jax.ShapeDtypeStruct((rows, hidden), x.dtype),
        grid=(num_tiles,),
        in_specs=[
            pl.BlockSpec((tile_rows, hidden), lambda i: (i, 0)),
            pl.BlockSpec((1, hidden), lambda i: (0, 0)),
            pl.BlockSpec((1, hidden), lambda i: (0, 0)),
        ],
        out_specs=pl.BlockSpec((tile_rows, hidden), lambda i: (i, 0)),
        compiler_params=pltpu.CompilerParams(
            dimension_semantics=("parallel",),
            vmem_limit_bytes=vmem_limit,
        ),
        cost_estimate=cost,
    )(x2d, gamma, beta)

    return out2d.reshape(orig_shape)


# ------------------------------ reference -----------------------------------


def _reference(x, a_2, b_2, eps):
    mean = jnp.mean(x, axis=-1, keepdims=True)
    std = jnp.std(x, axis=-1, keepdims=True, ddof=1)
    return a_2 * (x - mean) / (std + eps) + b_2


if __name__ == "__main__":
    key = jax.random.PRNGKey(0)

    # Small but lane-dense shape (hidden = 128 = one full TPU lane row).
    batch, seq, hidden = 2, 8, 128

    # Deterministic parameter init, matching nn.Parameter(torch.ones/zeros(size)).
    a_2 = jnp.ones((hidden,), dtype=jnp.float32)
    b_2 = jnp.zeros((hidden,), dtype=jnp.float32)

    x = jax.random.normal(key, (batch, seq, hidden), dtype=jnp.float32)

    out = layer_norm(x, a_2, b_2, eps=1e-6)
    out = jax.block_until_ready(out)
    ref = _reference(x, a_2, b_2, 1e-6)
    assert jnp.allclose(out, ref, atol=1e-5, rtol=1e-5), "mismatch vs reference"

    # Second check: rows (=15) not a multiple of the tile — exercises the
    # ragged last block (no pad/slice) path.
    key2 = jax.random.PRNGKey(0)
    x2 = jax.random.normal(key2, (3, 5, hidden), dtype=jnp.float32)
    out2 = layer_norm(x2, a_2, b_2, eps=1e-6, tile_rows=8)
    out2 = jax.block_until_ready(out2)
    ref2 = _reference(x2, a_2, b_2, 1e-6)
    assert jnp.allclose(out2, ref2, atol=1e-5, rtol=1e-5), "mismatch vs reference (ragged)"

    print("KERNEL_OK")
</pallas_src>

<mosaic_0001>
module attributes {stable_mosaic.version = 11 : i64} {
  func.func @_layernorm_kernel(%arg0: i32, %arg1: memref<16x128xf32, #tpu.memory_space<vmem>>, %arg2: memref<1x128xf32, #tpu.memory_space<vmem>>, %arg3: memref<1x128xf32, #tpu.memory_space<vmem>>, %arg4: memref<16x128xf32, #tpu.memory_space<vmem>>) attributes {dimension_semantics = [#tpu.dimension_semantics<parallel>], iteration_bounds = array<i64: 1>, scalar_prefetch = 0 : i64, scratch_operands = 0 : i64, tpu.core_type = #tpu.core_type<tc>, window_params = [{transform_indices = @transform_0, window_bounds = array<i64: 16, 128>}, {pipeline_mode = #tpu.pipeline_mode<synchronous>, transform_indices = @transform_1, window_bounds = array<i64: 1, 128>}, {pipeline_mode = #tpu.pipeline_mode<synchronous>, transform_indices = @transform_2, window_bounds = array<i64: 1, 128>}, {transform_indices = @transform_3, window_bounds = array<i64: 16, 128>}]} {
    %c0 = arith.constant 0 : index
    %c0_0 = arith.constant 0 : index
    %0 = vector.load %arg1[%c0, %c0_0] : memref<16x128xf32, #tpu.memory_space<vmem>>, vector<16x128xf32>
    %cst = arith.constant dense<0.000000e+00> : vector<16xf32>
    %1 = vector.multi_reduction <add>, %0, %cst [1] : vector<16x128xf32> to vector<16xf32>
    %2 = vector.shape_cast %1 : vector<16xf32> to vector<16x1xf32>
    %cst_1 = arith.constant 1.280000e+02 : f32
    %3 = vector.broadcast %cst_1 : f32 to vector<16x1xf32>
    %4 = arith.divf %2, %3 : vector<16x1xf32>
    %5 = vector.broadcast %4 : vector<16x1xf32> to vector<16x128xf32>
    %6 = arith.subf %0, %5 : vector<16x128xf32>
    %7 = arith.mulf %6, %6 : vector<16x128xf32>
    %cst_2 = arith.constant dense<0.000000e+00> : vector<16xf32>
    %8 = vector.multi_reduction <add>, %7, %cst_2 [1] : vector<16x128xf32> to vector<16xf32>
    %9 = vector.shape_cast %8 : vector<16xf32> to vector<16x1xf32>
    %cst_3 = arith.constant 1.270000e+02 : f32
    %10 = vector.broadcast %cst_3 : f32 to vector<16x1xf32>
    %11 = arith.divf %9, %10 : vector<16x1xf32>
    %12 = math.sqrt %11 : vector<16x1xf32>
    %cst_4 = arith.constant 9.99999997E-7 : f32
    %13 = vector.broadcast %cst_4 : f32 to vector<16x1xf32>
    %14 = arith.addf %12, %13 : vector<16x1xf32>
    %15 = tpu.reciprocal %14 {approx = true} : vector<16x1xf32> -> vector<16x1xf32>
    %16 = arith.mulf %14, %15 : vector<16x1xf32>
    %cst_5 = arith.constant 2.000000e+00 : f32
    %17 = vector.broadcast %cst_5 : f32 to vector<16x1xf32>
    %18 = arith.subf %17, %16 : vector<16x1xf32>
    %19 = arith.mulf %15, %18 : vector<16x1xf32>
    %c0_6 = arith.constant 0 : index
    %c0_7 = arith.constant 0 : index
    %20 = vector.load %arg2[%c0_6, %c0_7] : memref<1x128xf32, #tpu.memory_space<vmem>>, vector<1x128xf32>
    %21 = vector.broadcast %19 : vector<16x1xf32> to vector<16x128xf32>
    %22 = arith.mulf %6, %21 : vector<16x128xf32>
    %23 = vector.broadcast %20 : vector<1x128xf32> to vector<16x128xf32>
    %24 = arith.mulf %23, %22 : vector<16x128xf32>
    %c0_8 = arith.constant 0 : index
    %c0_9 = arith.constant 0 : index
    %25 = vector.load %arg3[%c0_8, %c0_9] : memref<1x128xf32, #tpu.memory_space<vmem>>, vector<1x128xf32>
    %26 = vector.broadcast %25 : vector<1x128xf32> to vector<16x128xf32>
    %27 = arith.addf %24, %26 : vector<16x128xf32>
    %c0_10 = arith.constant 0 : index
    %c0_11 = arith.constant 0 : index
    %28 = vector.load %arg4[%c0_10, %c0_11] : memref<16x128xf32, #tpu.memory_space<vmem>>, vector<16x128xf32>
    tpu.vector_store %arg4[%c0_10, %c0_11], %27 {strides = array<i32>} : memref<16x128xf32, #tpu.memory_space<vmem>>, vector<16x128xf32>,
    return
  }
  func.func @transform_0(%arg0: i32) -> (i32, i32) {
    %c0_i32 = arith.constant 0 : i32
    %c0_i32_0 = arith.constant 0 : i32
    return %arg0, %c0_i32 : i32, i32
  }
  func.func @transform_1(%arg0: i32) -> (i32, i32) {
    %c0_i32 = arith.constant 0 : i32
    %c0_i32_0 = arith.constant 0 : i32
    %c0_i32_1 = arith.constant 0 : i32
    return %c0_i32, %c0_i32_0 : i32, i32
  }
  func.func @transform_2(%arg0: i32) -> (i32, i32) {
    %c0_i32 = arith.constant 0 : i32
    %c0_i32_0 = arith.constant 0 : i32
    %c0_i32_1 = arith.constant 0 : i32
    return %c0_i32, %c0_i32_0 : i32, i32
  }
  func.func @transform_3(%arg0: i32) -> (i32, i32) {
    %c0_i32 = arith.constant 0 : i32
    %c0_i32_0 = arith.constant 0 : i32
    return %arg0, %c0_i32 : i32, i32
  }
}

</mosaic_0001>

<llo_original>
// kernel: tpu_custom_call.1
$region0: #{tpu_custom_call.1}
  #allocation0 [shape = 'u32[]', space=smem, size = 0x4, offset = 0x4, fixed_abs, tag = 'smem constant byte address 0x4 - core index']
  #allocation1 [shape = 'u32[144,128]{1,0:T(1,128)}', space=vmem, size = 0x12000, scoped, tag = 'internal scratch']
  %s0 = inlined_call_operand.hbm [shape: f32[16,128], index: 0, kind: input, shape index: {}]
  %s1 = inlined_call_operand.vmem [shape: f32[1,128], index: 1, kind: input, shape index: {}]
  %s2 = inlined_call_operand.vmem [shape: f32[1,128], index: 2, kind: input, shape index: {}]
  %s3 = inlined_call_operand.hbm [shape: f32[16,128], index: 3, kind: output, shape index: {}]
  %s4 = sld [smem:[#allocation0]]
  $region26: #{tpu_custom_call.1} parent=0
    _
  %s6 = ssub.s32 1, %s4
  %s7 = scalar_select 0, %s6, %s4
  $region1: #{tpu_custom_call.1} parent=0
    #allocation2 [shape = 'u8[8192]{0}', space=vmem, size = 0x2000, scoped, tag = 'input window, operand 0, single buffered']
    #allocation3 [shape = 's32[1]{0}', space=sflag, size = 0x4, scoped, tag = 'scoped memory for tpu_custom_call.1']
    #allocation4 [shape = 's32[1]{0}', space=sflag, size = 0x4, scoped, tag = 'scoped memory for tpu_custom_call.1']
    #allocation5 [shape = 'u8[8192]{0}', space=vmem, size = 0x2000, scoped, tag = 'output window, operand 0, single buffered']
    %8 = vsyncpa [#allocation3], 0
    %9 = vsyncpa [#allocation4], 0
    // Predicated region
    $region2: #{tpu_custom_call.1} parent=1 // pred_check
      _
    $region3: #{tpu_custom_call.1} parent=1 // pred_check_branch
      %11 = sbr.rel (0) target = $region5
    $region4: #{tpu_custom_call.1} parent=1 // pred_region
      %s13 = ssub.s32 256, 256
      %14 = vsyncadd [#allocation3], %s13
      %s15 = sshll.u32 [#allocation2], 4
      %s16 = int_to_ptr.vmem [resolvable:$true] %s15
      %21 = dma.hbm_to_vmem [thread:$0]  %s0, 256, %s16, [#allocation3], 128, 128, 8
    $region5: #{tpu_custom_call.1} parent=1 // pred_fallthru
      _
    // Predicated region
    $region6: #{tpu_custom_call.1} parent=1 // pred_check
      _
    $region7: #{tpu_custom_call.1} parent=1 // pred_check_branch
      %23 = sbr.rel (0) target = $region9
    $region8: #{tpu_custom_call.1} parent=1 // pred_region
      _
    $region9: #{tpu_custom_call.1} parent=1 // pred_fallthru
      _
    // Predicated region
    $region10: #{tpu_custom_call.1} parent=1 // pred_check
      _
    $region11: #{tpu_custom_call.1} parent=1 // pred_check_branch
      %25 = sbr.rel (0) target = $region13
    $region12: #{tpu_custom_call.1} parent=1 // pred_region
      _
    $region13: #{tpu_custom_call.1} parent=1 // pred_fallthru
      _
    // Predicated region
    $region14: #{tpu_custom_call.1} parent=1 // pred_check
      _
    $region15: #{tpu_custom_call.1} parent=1 // pred_check_branch
      %27 = sbr.rel (0) target = $region17
    $region16: #{tpu_custom_call.1} parent=1 // pred_region
      %28 = dma.done [#allocation3], 256
    $region17: #{tpu_custom_call.1} parent=1 // pred_fallthru
      _
    %v29 = vld [vmem:[#allocation2] sm:$0xff]
    %v30 = vld [vmem:[#allocation2 + $0x8] sm:$0xff]
    %31 = vadd.xlane.f32.xlu0 %v29
    %v32 = vpop.xlane.xlu0 %31
    %33 = vadd.xlane.f32.xlu0 %v30
    %v34 = vpop.xlane.xlu0 %33
    %v35 = vrcp.pop 128.0
    %v36 = vmul.f32 %v32, %v35
    %v37 = vmul.f32 %v34, %v35
    %v38 = vsub.f32 %v29, %v36
    %v39 = vsub.f32 %v30, %v37
    %v40 = vmul.f32 %v38, %v38
    %v41 = vmul.f32 %v39, %v39
    %42 = vadd.xlane.f32.xlu0 %v40
    %v43 = vpop.xlane.xlu0 %42
    %44 = vadd.xlane.f32.xlu0 %v41
    %v45 = vpop.xlane.xlu0 %44
    %v46 = vrcp.pop 127.0
    %v47 = vmul.f32 %v43, %v46
    %v48 = vmul.f32 %v45, %v46
    %v49 = vrsqrt.pop %v47
    %v50 = vmul.f32 %v47, %v49
    %vm51 = vcmp.eq.f32.partialorder %v47, inf
    %v52 = vsel %vm51, %v47, %v50
    %vm53 = vcmp.eq.f32.partialorder %v47, 0.0
    %v54 = vand.u32 %v47, 2147483648
    %v55 = vsel %vm53, %v54, %v52
    %v56 = vrsqrt.pop %v48
    %v57 = vmul.f32 %v48, %v56
    %vm58 = vcmp.eq.f32.partialorder %v48, inf
    %v59 = vsel %vm58, %v48, %v57
    %vm60 = vcmp.eq.f32.partialorder %v48, 0.0
    %v61 = vand.u32 %v48, 2147483648
    %v62 = vsel %vm60, %v61, %v59
    %v63 = vadd.f32 %v55, 1e-06
    %v64 = vadd.f32 %v62, 1e-06
    %v65 = vrcp.pop %v63
    %v66 = vrcp.pop %v64
    %v67 = vmul.f32 %v63, %v65
    %v68 = vmul.f32 %v64, %v66
    %v69 = vsub.f32 2.0, %v67
    %v70 = vsub.f32 2.0, %v68
    %v71 = vmul.f32 %v65, %v69
    %v72 = vmul.f32 %v66, %v70
    %v73 = vld [vmem:[%s1] sm:$0x1]
    %v74 = vmul.f32 %v38, %v71
    %v75 = vmul.f32 %v39, %v72
    %v77 = vlaneseq
    %v78 = vshrl.u32 %v77, 7
    %v79 = vsub.s32 0, %v78
    %v80 = vrot.slane %v73, %v79
    %v82 = vmul.f32 %v80, %v74
    %v83 = vmul.f32 %v80, %v75
    %v84 = vld [vmem:[%s2] sm:$0x1]
    %v86 = vlaneseq
    %v87 = vshrl.u32 %v86, 7
    %v88 = vsub.s32 0, %v87
    %v89 = vrot.slane %v84, %v88
    %v91 = vadd.f32 %v82, %v89
    %v92 = vadd.f32 %v83, %v89
    %93 = vst [vmem:[#allocation5] sm:$0xff] %v91
    %94 = vst [vmem:[#allocation5 + $0x8] sm:$0xff] %v92
    // Predicated region
    $region18: #{tpu_custom_call.1} parent=1 // pred_check
      _
    $region19: #{tpu_custom_call.1} parent=1 // pred_check_branch
      %96 = sbr.rel (0) target = $region21
    $region20: #{tpu_custom_call.1} parent=1 // pred_region
      %s98 = ssub.s32 256, 256
      %99 = vsyncadd [#allocation4], %s98
      %s100 = sshll.u32 [#allocation5], 4
      %s101 = int_to_ptr.vmem [resolvable:$true] %s100
      %106 = dma.vmem_to_hbm [thread:$0]  %s101, 256, %s3, [#allocation4], 128, 128, 8
    $region21: #{tpu_custom_call.1} parent=1 // pred_fallthru
      _
    // Predicated region
    $region22: #{tpu_custom_call.1} parent=1 // pred_check
      _
    $region23: #{tpu_custom_call.1} parent=1 // pred_check_branch
      %108 = sbr.rel (0) target = $region25
    $region24: #{tpu_custom_call.1} parent=1 // pred_region
      %109 = dma.done [#allocation4], 256
    $region25: #{tpu_custom_call.1} parent=1 // pred_fallthru
      _
    %110 = vsyncpa [#allocation3], 1
    %111 = vsyncpa [#allocation4], 1

</llo_original>
